<compile_context>
chip_gen: v6e
topology: v6e:2x2x1
jax: 0.10.0
libtpu: 0.0.40
codegen_flags: <defaults>
</compile_context>

<pallas_src>
import functools

import jax
import jax.numpy as jnp
import numpy as np
from jax.experimental import pallas as pl
from jax.experimental.pallas import tpu as pltpu

_LANE_CHUNK = 512   # output lanes per MXU matmul; bounds the [K*K*C, chunk] patch buffer


def _taps_dot(src_ref, w_bf16, *, K, Wp, start, n):
    """One KxK 'same'-conv matmul over n flat output lanes starting at `start`.

    `src_ref` is a [C, Hp*Wp] zero-padded flat image (channels on sublanes, pixels on
    lanes).  The K*K taps are static lane-offset slices, cast to bf16 and stacked along
    the contraction axis, so the whole chunk is one MXU matmul of depth K*K*C.
    """
    taps = []
    for dy in range(K):
        for dx in range(K):
            base = start + dy * Wp + dx
            taps.append(src_ref[:, base:base + n].astype(jnp.bfloat16))
    patches = jnp.concatenate(taps, axis=0)                              # [K*K*C, n] bf16
    return jnp.dot(w_bf16, patches, preferred_element_type=jnp.float32)  # [C, n] f32


def _resblock_kernel(xpad_ref, mask_ref, w1_ref, b1_ref, w2_ref, b2_ref,
                     out_ref, y_ref, *, K, H, W, pad, lane_chunk):
    Wp = W + 2 * pad
    Hp = H + 2 * pad
    L = (H - 1) * Wp + W            # flat span covering every valid output pixel
    off = pad * (Wp + 1)            # flat offset of output pixel (0, 0) in padded layout
    tail = Hp * Wp - off - L
    C = xpad_ref.shape[0]

    # Re-zero the tiny pad strips of the persistent scratch each step so they act as
    # conv2's zero padding.  Cheaper and multi-core-safe compared with a one-shot
    # program_id==0 init (each TensorCore owns its own scratch under "parallel").
    if off:
        y_ref[:, :off] = jnp.zeros((C, off), y_ref.dtype)
    if tail:
        y_ref[:, off + L:] = jnp.zeros((C, tail), y_ref.dtype)

    w1 = w1_ref[...]
    b1 = b1_ref[...]
    w2 = w2_ref[...]
    b2 = b2_ref[...]

    # ---- conv1 (+bias) + ReLU, lane-chunked; row-end junk lanes are zeroed by the
    # ---- mask so they behave as padding for conv2; result lands in the bf16 scratch.
    for c0 in range(0, L, lane_chunk):
        n = min(lane_chunk, L - c0)
        acc = _taps_dot(xpad_ref, w1, K=K, Wp=Wp, start=c0, n=n)            # f32 [C, n]
        y = jnp.maximum(acc + b1, 0.0) * mask_ref[:, c0:c0 + n]
        y_ref[:, off + c0: off + c0 + n] = y.astype(y_ref.dtype)

    # ---- conv2 (+bias) + residual add (res_scale pre-folded into w2 / b2) ----------
    for c0 in range(0, L, lane_chunk):
        n = min(lane_chunk, L - c0)
        acc = _taps_dot(y_ref, w2, K=K, Wp=Wp, start=c0, n=n)               # f32 [C, n]
        out_ref[:, c0:c0 + n] = (acc + b2
                                 + xpad_ref[:, off + c0: off + c0 + n]
                                 ).astype(out_ref.dtype)

    # Lanes [L, H*Wp) of the row-padded output never hold valid pixels; zero them so
    # nothing uninitialised leaves the kernel (the wrapper slices them away).
    if H * Wp > L:
        out_ref[:, L:] = jnp.zeros((C, H * Wp - L), out_ref.dtype)


def resblock_forward(x_nchw, params, *, kernel_size=3, res_scale=1.0,
                     lane_chunk=_LANE_CHUNK):
    """ResBlock forward (conv -> ReLU -> conv, * res_scale, + x). x_nchw: [N, C, H, W] f32."""
    N, C, H, W = x_nchw.shape
    K = kernel_size
    p = K // 2
    Hp, Wp = H + 2 * p, W + 2 * p
    L = (H - 1) * Wp + W
    KKC = K * K * C

    x = x_nchw.astype(jnp.float32)
    # One zero-pad + free reshape (layout plumbing only — no K*K im2col copy in HBM).
    # TODO(synk): when chaining ResBlocks, keep activations in this padded-flat layout
    # between blocks so pad / un-flatten happen once per network, not once per block.
    x_pad = jnp.pad(x, ((0, 0), (0, 0), (p, p), (p, p))).reshape(N, C, Hp * Wp)

    # conv weight [Cout, Cin, K, K] -> bf16 [Cout, K*K*Cin] (tap-major, channel-minor),
    # matching the in-kernel patch stacking order.  bf16 feeds the MXU natively on
    # v5e/v6e/v7x; accumulation stays f32 inside the kernel.
    def pack(w, scale=1.0):
        w = jnp.transpose(w, (0, 2, 3, 1)).reshape(C, KKC) * jnp.float32(scale)
        return w.astype(jnp.bfloat16)

    w1 = pack(params["w1"])
    b1 = params["b1"].reshape(C, 1).astype(jnp.float32)
    w2 = pack(params["w2"], res_scale)                       # fold res_scale into conv2
    b2 = (params["b2"] * res_scale).reshape(C, 1).astype(jnp.float32)

    # Valid-lane mask of the row-stride-Wp flat layout (1.0 where column < W).
    mask = (jnp.arange(L, dtype=jnp.int32) % Wp < W).astype(jnp.float32)[None, :]

    kernel = functools.partial(_resblock_kernel, K=K, H=H, W=W, pad=p,
                               lane_chunk=lane_chunk)
    # TODO(synk): weights/bias/mask have constant index_maps; at large n_feat reclaim
    #   the second pipeline buffer (pipeline_mode=pl.Buffered(1) or a one-shot resident
    #   copy) — at this size the waste is a few tens of KB, so left as default.
    # TODO(synk): at this toy size (N=2) each TensorCore gets a single grid step so
    #   there is no prefetch/writeback overlap; at realistic sizes pack several images
    #   per step and/or add a row-block grid axis (K-1 row halos) to get >=4-8 steps
    #   per core, and size vmem_limit_bytes explicitly (v5e scoped default is 16 MiB).
    # TODO(synk): bn=True / act='prelu' / num_conv!=2 constructor variants not
    #   implemented (module defaults: bn=False, act='relu', num_conv=2).
    out_flat = pl.pallas_call(
        kernel,
        out_shape=jax.ShapeDtypeStruct((N, C, H * Wp), jnp.float32),
        grid=(N,),
        in_specs=[
            pl.BlockSpec((None, C, Hp * Wp), lambda n: (n, 0, 0)),   # padded image (f32)
            pl.BlockSpec((1, L), lambda n: (0, 0)),                  # valid-lane mask
            pl.BlockSpec((C, KKC), lambda n: (0, 0)),                # w1 (bf16, packed)
            pl.BlockSpec((C, 1), lambda n: (0, 0)),                  # b1 (f32)
            pl.BlockSpec((C, KKC), lambda n: (0, 0)),                # w2 (bf16, scaled)
            pl.BlockSpec((C, 1), lambda n: (0, 0)),                  # b2 (f32, scaled)
        ],
        out_specs=pl.BlockSpec((None, C, H * Wp), lambda n: (n, 0, 0)),
        scratch_shapes=[pltpu.VMEM((C, Hp * Wp), jnp.bfloat16)],     # padded-flat y
        compiler_params=pltpu.CompilerParams(
            dimension_semantics=("parallel",),   # images split across TensorCores
        ),
    )(x_pad, mask, w1, b1, w2, b2)

    # Row-padded layout -> NCHW: free reshape + one column slice (no extra pad pass).
    return out_flat.reshape(N, C, H, Wp)[:, :, :, :W]


def _reference(x, params, *, kernel_size, res_scale):
    """Pure-JAX (XLA conv, f32) reference of the PyTorch ResBlock forward, NCHW."""
    p = kernel_size // 2
    dn = ("NCHW", "OIHW", "NCHW")

    def conv(t, w, b):
        y = jax.lax.conv_general_dilated(t, w, (1, 1), [(p, p), (p, p)],
                                         dimension_numbers=dn)
        return y + b[None, :, None, None]

    y = jnp.maximum(conv(x, params["w1"], params["b1"]), 0.0)
    res = conv(y, params["w2"], params["b2"]) * res_scale
    return res + x


if __name__ == "__main__":
    N, n_feat, H, W = 2, 16, 16, 16
    kernel_size = 3
    res_scale = 0.5

    key = jax.random.PRNGKey(0)
    k1, k2, k3, k4, k5 = jax.random.split(key, 5)
    # Deterministic synthetic parameters (two KxK convs with bias, as in the module).
    params = {
        "w1": 0.1 * jax.random.normal(k1, (n_feat, n_feat, kernel_size, kernel_size), jnp.float32),
        "b1": 0.05 * jax.random.normal(k2, (n_feat,), jnp.float32),
        "w2": 0.1 * jax.random.normal(k3, (n_feat, n_feat, kernel_size, kernel_size), jnp.float32),
        "b2": 0.05 * jax.random.normal(k4, (n_feat,), jnp.float32),
    }
    x = jax.random.normal(k5, (N, n_feat, H, W), jnp.float32)

    out = jax.block_until_ready(
        resblock_forward(x, params, kernel_size=kernel_size, res_scale=res_scale))
    ref = jax.block_until_ready(
        _reference(x, params, kernel_size=kernel_size, res_scale=res_scale))

    assert out.shape == (N, n_feat, H, W)
    # Tolerance loosened vs. the pure-f32 version because the MXU operands are bf16
    # (two chained KxK convs -> ~1e-2 worst-case absolute deviation); f32 reference.
    np.testing.assert_allclose(np.asarray(out), np.asarray(ref), rtol=2e-2, atol=2e-2)
    print("KERNEL_OK")
</pallas_src>

<mosaic_0001>
module attributes {stable_mosaic.version = 11 : i64} {
  func.func @_resblock_kernel(%arg0: i32, %arg1: memref<1x16x324xf32, #tpu.memory_space<vmem>>, %arg2: memref<1x286xf32, #tpu.memory_space<vmem>>, %arg3: memref<16x144xbf16, #tpu.memory_space<vmem>>, %arg4: memref<16x1xf32, #tpu.memory_space<vmem>>, %arg5: memref<16x144xbf16, #tpu.memory_space<vmem>>, %arg6: memref<16x1xf32, #tpu.memory_space<vmem>>, %arg7: memref<1x16x288xf32, #tpu.memory_space<vmem>>, %arg8: memref<16x324xbf16, #tpu.memory_space<vmem>>) attributes {dimension_semantics = [#tpu.dimension_semantics<parallel>], iteration_bounds = array<i64: 2>, scalar_prefetch = 0 : i64, scratch_operands = 1 : i64, tpu.core_type = #tpu.core_type<tc>, window_params = [{transform_indices = @transform_0, window_bounds = array<i64: 1, 16, 324>}, {pipeline_mode = #tpu.pipeline_mode<synchronous>, transform_indices = @transform_1, window_bounds = array<i64: 1, 286>}, {pipeline_mode = #tpu.pipeline_mode<synchronous>, transform_indices = @transform_2, window_bounds = array<i64: 16, 144>}, {pipeline_mode = #tpu.pipeline_mode<synchronous>, transform_indices = @transform_3, window_bounds = array<i64: 16, 1>}, {pipeline_mode = #tpu.pipeline_mode<synchronous>, transform_indices = @transform_4, window_bounds = array<i64: 16, 144>}, {pipeline_mode = #tpu.pipeline_mode<synchronous>, transform_indices = @transform_5, window_bounds = array<i64: 16, 1>}, {transform_indices = @transform_6, window_bounds = array<i64: 1, 16, 288>}]} {
    %cst = arith.constant 0.000000e+00 : bf16
    %0 = vector.broadcast %cst : bf16 to vector<16x19xbf16>
    %c0 = arith.constant 0 : index
    %c0_0 = arith.constant 0 : index
    %1 = vector.load %arg8[%c0, %c0_0] : memref<16x324xbf16, #tpu.memory_space<vmem>>, vector<16x19xbf16>
    tpu.vector_store %arg8[%c0, %c0_0], %0 {strides = array<i32>} : memref<16x324xbf16, #tpu.memory_space<vmem>>, vector<16x19xbf16>,
    %cst_1 = arith.constant 0.000000e+00 : bf16
    %2 = vector.broadcast %cst_1 : bf16 to vector<16x19xbf16>
    %c0_2 = arith.constant 0 : index
    %c305 = arith.constant 305 : index
    %3 = vector.load %arg8[%c0_2, %c305] : memref<16x324xbf16, #tpu.memory_space<vmem>>, vector<16x19xbf16>
    tpu.vector_store %arg8[%c0_2, %c305], %2 {strides = array<i32>} : memref<16x324xbf16, #tpu.memory_space<vmem>>, vector<16x19xbf16>,
    %c0_3 = arith.constant 0 : index
    %c0_4 = arith.constant 0 : index
    %4 = vector.load %arg3[%c0_3, %c0_4] : memref<16x144xbf16, #tpu.memory_space<vmem>>, vector<16x144xbf16>
    %c0_5 = arith.constant 0 : index
    %c0_6 = arith.constant 0 : index
    %5 = vector.load %arg4[%c0_5, %c0_6] : memref<16x1xf32, #tpu.memory_space<vmem>>, vector<16x1xf32>
    %c0_7 = arith.constant 0 : index
    %c0_8 = arith.constant 0 : index
    %6 = vector.load %arg5[%c0_7, %c0_8] : memref<16x144xbf16, #tpu.memory_space<vmem>>, vector<16x144xbf16>
    %c0_9 = arith.constant 0 : index
    %c0_10 = arith.constant 0 : index
    %7 = vector.load %arg6[%c0_9, %c0_10] : memref<16x1xf32, #tpu.memory_space<vmem>>, vector<16x1xf32>
    %c0_11 = arith.constant 0 : index
    %c0_12 = arith.constant 0 : index
    %c0_13 = arith.constant 0 : index
    %8 = vector.load %arg1[%c0_11, %c0_12, %c0_13] : memref<1x16x324xf32, #tpu.memory_space<vmem>>, vector<1x16x286xf32>
    %9 = vector.shape_cast %8 : vector<1x16x286xf32> to vector<16x286xf32>
    %10 = arith.truncf %9 : vector<16x286xf32> to vector<16x286xbf16>
    %c0_14 = arith.constant 0 : index
    %c0_15 = arith.constant 0 : index
    %c1 = arith.constant 1 : index
    %11 = vector.load %arg1[%c0_14, %c0_15, %c1] : memref<1x16x324xf32, #tpu.memory_space<vmem>>, vector<1x16x286xf32>
    %12 = vector.shape_cast %11 : vector<1x16x286xf32> to vector<16x286xf32>
    %13 = arith.truncf %12 : vector<16x286xf32> to vector<16x286xbf16>
    %c0_16 = arith.constant 0 : index
    %c0_17 = arith.constant 0 : index
    %c2 = arith.constant 2 : index
    %14 = vector.load %arg1[%c0_16, %c0_17, %c2] : memref<1x16x324xf32, #tpu.memory_space<vmem>>, vector<1x16x286xf32>
    %15 = vector.shape_cast %14 : vector<1x16x286xf32> to vector<16x286xf32>
    %16 = arith.truncf %15 : vector<16x286xf32> to vector<16x286xbf16>
    %c0_18 = arith.constant 0 : index
    %c0_19 = arith.constant 0 : index
    %c18 = arith.constant 18 : index
    %17 = vector.load %arg1[%c0_18, %c0_19, %c18] : memref<1x16x324xf32, #tpu.memory_space<vmem>>, vector<1x16x286xf32>
    %18 = vector.shape_cast %17 : vector<1x16x286xf32> to vector<16x286xf32>
    %19 = arith.truncf %18 : vector<16x286xf32> to vector<16x286xbf16>
    %c0_20 = arith.constant 0 : index
    %c0_21 = arith.constant 0 : index
    %c19 = arith.constant 19 : index
    %20 = vector.load %arg1[%c0_20, %c0_21, %c19] : memref<1x16x324xf32, #tpu.memory_space<vmem>>, vector<1x16x286xf32>
    %21 = vector.shape_cast %20 : vector<1x16x286xf32> to vector<16x286xf32>
    %22 = arith.truncf %21 : vector<16x286xf32> to vector<16x286xbf16>
    %c0_22 = arith.constant 0 : index
    %c0_23 = arith.constant 0 : index
    %c20 = arith.constant 20 : index
    %23 = vector.load %arg1[%c0_22, %c0_23, %c20] : memref<1x16x324xf32, #tpu.memory_space<vmem>>, vector<1x16x286xf32>
    %24 = vector.shape_cast %23 : vector<1x16x286xf32> to vector<16x286xf32>
    %25 = arith.truncf %24 : vector<16x286xf32> to vector<16x286xbf16>
    %c0_24 = arith.constant 0 : index
    %c0_25 = arith.constant 0 : index
    %c36 = arith.constant 36 : index
    %26 = vector.load %arg1[%c0_24, %c0_25, %c36] : memref<1x16x324xf32, #tpu.memory_space<vmem>>, vector<1x16x286xf32>
    %27 = vector.shape_cast %26 : vector<1x16x286xf32> to vector<16x286xf32>
    %28 = arith.truncf %27 : vector<16x286xf32> to vector<16x286xbf16>
    %c0_26 = arith.constant 0 : index
    %c0_27 = arith.constant 0 : index
    %c37 = arith.constant 37 : index
    %29 = vector.load %arg1[%c0_26, %c0_27, %c37] : memref<1x16x324xf32, #tpu.memory_space<vmem>>, vector<1x16x286xf32>
    %30 = vector.shape_cast %29 : vector<1x16x286xf32> to vector<16x286xf32>
    %31 = arith.truncf %30 : vector<16x286xf32> to vector<16x286xbf16>
    %c0_28 = arith.constant 0 : index
    %c0_29 = arith.constant 0 : index
    %c38 = arith.constant 38 : index
    %32 = vector.load %arg1[%c0_28, %c0_29, %c38] : memref<1x16x324xf32, #tpu.memory_space<vmem>>, vector<1x16x286xf32>
    %33 = vector.shape_cast %32 : vector<1x16x286xf32> to vector<16x286xf32>
    %34 = arith.truncf %33 : vector<16x286xf32> to vector<16x286xbf16>
    %35 = tpu.concatenate %10, %13, %16, %19, %22, %25, %28, %31, %34 in 0 : vector<16x286xbf16>, vector<16x286xbf16>, vector<16x286xbf16>, vector<16x286xbf16>, vector<16x286xbf16>, vector<16x286xbf16>, vector<16x286xbf16>, vector<16x286xbf16>, vector<16x286xbf16> -> vector<144x286xbf16>
    %cst_30 = arith.constant dense<0.000000e+00> : vector<16x286xf32>
    %36 = tpu.matmul %4, %35, %cst_30 {dimension_numbers = #tpu.dot_dimension_numbers<[1], [0], [0], [1], [0, 0, 1, 1], [], []>} : vector<16x144xbf16>, vector<144x286xbf16>, vector<16x286xf32> -> vector<16x286xf32>
    %37 = vector.broadcast %5 : vector<16x1xf32> to vector<16x286xf32>
    %38 = arith.addf %36, %37 : vector<16x286xf32>
    %cst_31 = arith.constant 0.000000e+00 : f32
    %39 = vector.broadcast %cst_31 : f32 to vector<16x286xf32>
    %40 = arith.maximumf %38, %39 : vector<16x286xf32>
    %c0_32 = arith.constant 0 : index
    %c0_33 = arith.constant 0 : index
    %41 = vector.load %arg2[%c0_32, %c0_33] : memref<1x286xf32, #tpu.memory_space<vmem>>, vector<1x286xf32>
    %42 = vector.broadcast %41 : vector<1x286xf32> to vector<16x286xf32>
    %43 = arith.mulf %40, %42 : vector<16x286xf32>
    %44 = arith.truncf %43 : vector<16x286xf32> to vector<16x286xbf16>
    %c0_34 = arith.constant 0 : index
    %c19_35 = arith.constant 19 : index
    %45 = vector.load %arg8[%c0_34, %c19_35] : memref<16x324xbf16, #tpu.memory_space<vmem>>, vector<16x286xbf16>
    tpu.vector_store %arg8[%c0_34, %c19_35], %44 {strides = array<i32>} : memref<16x324xbf16, #tpu.memory_space<vmem>>, vector<16x286xbf16>,
    %c0_36 = arith.constant 0 : index
    %c0_37 = arith.constant 0 : index
    %46 = vector.load %arg8[%c0_36, %c0_37] : memref<16x324xbf16, #tpu.memory_space<vmem>>, vector<16x286xbf16>
    %c0_38 = arith.constant 0 : index
    %c1_39 = arith.constant 1 : index
    %47 = vector.load %arg8[%c0_38, %c1_39] : memref<16x324xbf16, #tpu.memory_space<vmem>>, vector<16x286xbf16>
    %c0_40 = arith.constant 0 : index
    %c2_41 = arith.constant 2 : index
    %48 = vector.load %arg8[%c0_40, %c2_41] : memref<16x324xbf16, #tpu.memory_space<vmem>>, vector<16x286xbf16>
    %c0_42 = arith.constant 0 : index
    %c18_43 = arith.constant 18 : index
    %49 = vector.load %arg8[%c0_42, %c18_43] : memref<16x324xbf16, #tpu.memory_space<vmem>>, vector<16x286xbf16>
    %c0_44 = arith.constant 0 : index
    %c19_45 = arith.constant 19 : index
    %50 = vector.load %arg8[%c0_44, %c19_45] : memref<16x324xbf16, #tpu.memory_space<vmem>>, vector<16x286xbf16>
    %c0_46 = arith.constant 0 : index
    %c20_47 = arith.constant 20 : index
    %51 = vector.load %arg8[%c0_46, %c20_47] : memref<16x324xbf16, #tpu.memory_space<vmem>>, vector<16x286xbf16>
    %c0_48 = arith.constant 0 : index
    %c36_49 = arith.constant 36 : index
    %52 = vector.load %arg8[%c0_48, %c36_49] : memref<16x324xbf16, #tpu.memory_space<vmem>>, vector<16x286xbf16>
    %c0_50 = arith.constant 0 : index
    %c37_51 = arith.constant 37 : index
    %53 = vector.load %arg8[%c0_50, %c37_51] : memref<16x324xbf16, #tpu.memory_space<vmem>>, vector<16x286xbf16>
    %c0_52 = arith.constant 0 : index
    %c38_53 = arith.constant 38 : index
    %54 = vector.load %arg8[%c0_52, %c38_53] : memref<16x324xbf16, #tpu.memory_space<vmem>>, vector<16x286xbf16>
    %55 = tpu.concatenate %46, %47, %48, %49, %50, %51, %52, %53, %54 in 0 : vector<16x286xbf16>, vector<16x286xbf16>, vector<16x286xbf16>, vector<16x286xbf16>, vector<16x286xbf16>, vector<16x286xbf16>, vector<16x286xbf16>, vector<16x286xbf16>, vector<16x286xbf16> -> vector<144x286xbf16>
    %cst_54 = arith.constant dense<0.000000e+00> : vector<16x286xf32>
    %56 = tpu.matmul %6, %55, %cst_54 {dimension_numbers = #tpu.dot_dimension_numbers<[1], [0], [0], [1], [0, 0, 1, 1], [], []>} : vector<16x144xbf16>, vector<144x286xbf16>, vector<16x286xf32> -> vector<16x286xf32>
    %57 = vector.broadcast %7 : vector<16x1xf32> to vector<16x286xf32>
    %58 = arith.addf %56, %57 : vector<16x286xf32>
    %c0_55 = arith.constant 0 : index
    %c0_56 = arith.constant 0 : index
    %c19_57 = arith.constant 19 : index
    %59 = vector.load %arg1[%c0_55, %c0_56, %c19_57] : memref<1x16x324xf32, #tpu.memory_space<vmem>>, vector<1x16x286xf32>
    %60 = vector.shape_cast %59 : vector<1x16x286xf32> to vector<16x286xf32>
    %61 = arith.addf %58, %60 : vector<16x286xf32>
    %c0_58 = arith.constant 0 : index
    %c0_59 = arith.constant 0 : index
    %c0_60 = arith.constant 0 : index
    %62 = vector.load %arg7[%c0_58, %c0_59, %c0_60] : memref<1x16x288xf32, #tpu.memory_space<vmem>>, vector<1x16x286xf32>
    %63 = vector.shape_cast %62 : vector<1x16x286xf32> to vector<16x286xf32>
    %64 = vector.shape_cast %61 : vector<16x286xf32> to vector<1x16x286xf32>
    tpu.vector_store %arg7[%c0_58, %c0_59, %c0_60], %64 {strides = array<i32>} : memref<1x16x288xf32, #tpu.memory_space<vmem>>, vector<1x16x286xf32>,
    %cst_61 = arith.constant 0.000000e+00 : f32
    %65 = vector.broadcast %cst_61 : f32 to vector<16x2xf32>
    %c0_62 = arith.constant 0 : index
    %c0_63 = arith.constant 0 : index
    %c286 = arith.constant 286 : index
    %66 = vector.load %arg7[%c0_62, %c0_63, %c286] : memref<1x16x288xf32, #tpu.memory_space<vmem>>, vector<1x16x2xf32>
    %67 = vector.shape_cast %66 : vector<1x16x2xf32> to vector<16x2xf32>
    %68 = vector.shape_cast %65 : vector<16x2xf32> to vector<1x16x2xf32>
    tpu.vector_store %arg7[%c0_62, %c0_63, %c286], %68 {strides = array<i32>} : memref<1x16x288xf32, #tpu.memory_space<vmem>>, vector<1x16x2xf32>,
    return
  }
  func.func @transform_0(%arg0: i32) -> (i32, i32, i32) {
    %c0_i32 = arith.constant 0 : i32
    %c0_i32_0 = arith.constant 0 : i32
    %c0_i32_1 = arith.constant 0 : i32
    return %arg0, %c0_i32, %c0_i32_0 : i32, i32, i32
  }
  func.func @transform_1(%arg0: i32) -> (i32, i32) {
    %c0_i32 = arith.constant 0 : i32
    %c0_i32_0 = arith.constant 0 : i32
    %c0_i32_1 = arith.constant 0 : i32
    return %c0_i32, %c0_i32_0 : i32, i32
  }
  func.func @transform_2(%arg0: i32) -> (i32, i32) {
    %c0_i32 = arith.constant 0 : i32
    %c0_i32_0 = arith.constant 0 : i32
    %c0_i32_1 = arith.constant 0 : i32
    return %c0_i32, %c0_i32_0 : i32, i32
  }
  func.func @transform_3(%arg0: i32) -> (i32, i32) {
    %c0_i32 = arith.constant 0 : i32
    %c0_i32_0 = arith.constant 0 : i32
    %c0_i32_1 = arith.constant 0 : i32
    return %c0_i32, %c0_i32_0 : i32, i32
  }
  func.func @transform_4(%arg0: i32) -> (i32, i32) {
    %c0_i32 = arith.constant 0 : i32
    %c0_i32_0 = arith.constant 0 : i32
    %c0_i32_1 = arith.constant 0 : i32
    return %c0_i32, %c0_i32_0 : i32, i32
  }
  func.func @transform_5(%arg0: i32) -> (i32, i32) {
    %c0_i32 = arith.constant 0 : i32
    %c0_i32_0 = arith.constant 0 : i32
    %c0_i32_1 = arith.constant 0 : i32
    return %c0_i32, %c0_i32_0 : i32, i32
  }
  func.func @transform_6(%arg0: i32) -> (i32, i32, i32) {
    %c0_i32 = arith.constant 0 : i32
    %c0_i32_0 = arith.constant 0 : i32
    %c0_i32_1 = arith.constant 0 : i32
    return %arg0, %c0_i32, %c0_i32_0 : i32, i32, i32
  }
}

</mosaic_0001>

<llo_original>
// kernel: tpu_custom_call.1
$region0: #{tpu_custom_call.1}
  #allocation0 [shape = 'u32[]', space=smem, size = 0x4, offset = 0x4, fixed_abs, tag = 'smem constant byte address 0x4 - core index']
  #allocation1 [shape = 'u32[144,128]{1,0:T(1,128)}', space=vmem, size = 0x12000, scoped, tag = 'internal scratch']
  #allocation2 [shape = 'bf16[16,324]{1,0:T(8,128)(2,1)}', space=vmem, size = 0x3000, scoped, tag = 'scratch operand']
  %s0 = inlined_call_operand.hbm [shape: f32[2,16,324], index: 0, kind: input, shape index: {}]
  %s1 = inlined_call_operand.vmem [shape: f32[1,286], index: 1, kind: input, shape index: {}]
  %s2 = inlined_call_operand.vmem [shape: bf16[16,144], index: 2, kind: input, shape index: {}]
  %s3 = inlined_call_operand.vmem [shape: f32[16,1], index: 3, kind: input, shape index: {}]
  %s4 = inlined_call_operand.vmem [shape: bf16[16,144], index: 4, kind: input, shape index: {}]
  %s5 = inlined_call_operand.vmem [shape: f32[16,1], index: 5, kind: input, shape index: {}]
  %s6 = inlined_call_operand.hbm [shape: f32[2,16,288], index: 6, kind: output, shape index: {}]
  %s7 = sld [smem:[#allocation0]]
  $region61: #{tpu_custom_call.1} parent=0
    _
  %s9 = ssub.s32 1, %s7
  %s10 = scalar_select 0, %s9, %s7
  $region1: #{tpu_custom_call.1} parent=0
    #allocation3 [shape = 'u8[49152]{0}', space=vmem, size = 0xc000, scoped, tag = 'input window, operand 0']
    #allocation4 [shape = 's32[2]{0}', space=sflag, size = 0x8, scoped, tag = 'scoped memory for tpu_custom_call.1']
    #allocation5 [shape = 's32[2]{0}', space=sflag, size = 0x8, scoped, tag = 'scoped memory for tpu_custom_call.1']
    #allocation6 [shape = 'u8[49152]{0}', space=vmem, size = 0xc000, scoped, tag = 'output window, operand 0']
    %11 = vsyncpa [#allocation4], 0
    %s12 = scalar_lea.sflag [#allocation4], 1
    %13 = vsyncpa %s12, 0
    %14 = vsyncpa [#allocation5], 0
    %s15 = scalar_lea.sflag [#allocation5], 1
    %16 = vsyncpa %s15, 0
    loop: start=0, step=1, limit=4
    $region2: #{tpu_custom_call.1} parent=1 // loop_pre_header
      _
    $region3: #{tpu_custom_call.1} parent=1 // loop_header
      %s18 = sphi 0, %s22
      %p19 = scmp.ge.s32.totalorder %s18, 4
      %s28 = sphi 0, %s30
      %s31 = sphi 0, %s28
      %s32 = sphi 0, %s31
      %s48 = sphi 0, %s32
      %s52 = sphi 0, %s52
      %s54 = sphi 0, %s52
      %s55 = sphi 0, %s54
      %s69 = sphi 0, %s55
      %s73 = sphi 0, %s73
      %s75 = sphi 0, %s73
      %s76 = sphi 0, %s75
      %s90 = sphi 0, %s76
      %s94 = sphi 0, %s94
      %s96 = sphi 0, %s94
      %s97 = sphi 0, %s96
      %s111 = sphi 0, %s97
      %s115 = sphi 0, %s115
      %s117 = sphi 0, %s115
      %s118 = sphi 0, %s117
      %s132 = sphi 0, %s118
      %s136 = sphi 0, %s136
      %s138 = sphi 0, %s136
      %s139 = sphi 0, %s138
      %s153 = sphi 0, %s139
      %s159 = sphi 0, %s161
      %s162 = sphi 0, %s159
      %s163 = sphi 0, %s162
      %s179 = sphi 0, %s163
    $region4: #{tpu_custom_call.1} parent=1 // loop_header_branch
      %21 = sbr.rel (%p19) target = $region8
    $region5: #{tpu_custom_call.1} parent=1 // loop_body
      %s23 = ssub.s32 %s18, 1
      %s24 = ssub.s32 %s18, 2
      %s25 = sadd.s32 %s18, 1
      %s26 = ssub.s32 %s18, %s25
      %p27 = scmp.eq.s32.totalorder %s26, 0
      %s29 = sadd.s32 %s28, 1
      %s30 = scalar_select %p27, %s28, %s29
      %p33 = pneg %p27
      %p34 = scmp.eq.s32.totalorder %s18, 1
      %p35 = por %p33, %p34
      %p36 = scmp.ne.s32.totalorder %s28, %s31
      %p37 = scmp.eq.s32.totalorder %s18, 0
      %p38 = por %p36, %p37
      %p39 = scmp.ne.s32.totalorder %s28, %s31
      %p40 = scmp.eq.s32.totalorder %s23, 1
      %p41 = por %p39, %p40
      %p42 = scmp.ne.s32.totalorder %s31, %s32
      %p43 = scmp.eq.s32.totalorder %s23, 0
      %p44 = por %p42, %p43
      %p45 = scmp.ne.s32.totalorder %s31, %s32
      %p46 = scmp.eq.s32.totalorder %s24, 1
      %p47 = por %p45, %p46
      %p49 = scmp.ne.s32.totalorder %s32, %s48
      %p50 = scmp.eq.s32.totalorder %s24, 0
      %p51 = por %p49, %p50
      %s53 = sadd.s32 %s52, 1
      %p56 = scmp.eq.s32.totalorder %s18, 1
      %p57 = scmp.ne.s32.totalorder %s52, %s54
      %p58 = scmp.eq.s32.totalorder %s18, 0
      %p59 = por %p57, %p58
      %p60 = scmp.ne.s32.totalorder %s52, %s54
      %p61 = scmp.eq.s32.totalorder %s23, 1
      %p62 = por %p60, %p61
      %p63 = scmp.ne.s32.totalorder %s54, %s55
      %p64 = scmp.eq.s32.totalorder %s23, 0
      %p65 = por %p63, %p64
      %p66 = scmp.ne.s32.totalorder %s54, %s55
      %p67 = scmp.eq.s32.totalorder %s24, 1
      %p68 = por %p66, %p67
      %p70 = scmp.ne.s32.totalorder %s55, %s69
      %p71 = scmp.eq.s32.totalorder %s24, 0
      %p72 = por %p70, %p71
      %s74 = sadd.s32 %s73, 1
      %p77 = scmp.eq.s32.totalorder %s18, 1
      %p78 = scmp.ne.s32.totalorder %s73, %s75
      %p79 = scmp.eq.s32.totalorder %s18, 0
      %p80 = por %p78, %p79
      %p81 = scmp.ne.s32.totalorder %s73, %s75
      %p82 = scmp.eq.s32.totalorder %s23, 1
      %p83 = por %p81, %p82
      %p84 = scmp.ne.s32.totalorder %s75, %s76
      %p85 = scmp.eq.s32.totalorder %s23, 0
      %p86 = por %p84, %p85
      %p87 = scmp.ne.s32.totalorder %s75, %s76
      %p88 = scmp.eq.s32.totalorder %s24, 1
      %p89 = por %p87, %p88
      %p91 = scmp.ne.s32.totalorder %s76, %s90
      %p92 = scmp.eq.s32.totalorder %s24, 0
      %p93 = por %p91, %p92
      %s95 = sadd.s32 %s94, 1
      %p98 = scmp.eq.s32.totalorder %s18, 1
      %p99 = scmp.ne.s32.totalorder %s94, %s96
      %p100 = scmp.eq.s32.totalorder %s18, 0
      %p101 = por %p99, %p100
      %p102 = scmp.ne.s32.totalorder %s94, %s96
      %p103 = scmp.eq.s32.totalorder %s23, 1
      %p104 = por %p102, %p103
      %p105 = scmp.ne.s32.totalorder %s96, %s97
      %p106 = scmp.eq.s32.totalorder %s23, 0
      %p107 = por %p105, %p106
      %p108 = scmp.ne.s32.totalorder %s96, %s97
      %p109 = scmp.eq.s32.totalorder %s24, 1
      %p110 = por %p108, %p109
      %p112 = scmp.ne.s32.totalorder %s97, %s111
      %p113 = scmp.eq.s32.totalorder %s24, 0
      %p114 = por %p112, %p113
      %s116 = sadd.s32 %s115, 1
      %p119 = scmp.eq.s32.totalorder %s18, 1
      %p120 = scmp.ne.s32.totalorder %s115, %s117
      %p121 = scmp.eq.s32.totalorder %s18, 0
      %p122 = por %p120, %p121
      %p123 = scmp.ne.s32.totalorder %s115, %s117
      %p124 = scmp.eq.s32.totalorder %s23, 1
      %p125 = por %p123, %p124
      %p126 = scmp.ne.s32.totalorder %s117, %s118
      %p127 = scmp.eq.s32.totalorder %s23, 0
      %p128 = por %p126, %p127
      %p129 = scmp.ne.s32.totalorder %s117, %s118
      %p130 = scmp.eq.s32.totalorder %s24, 1
      %p131 = por %p129, %p130
      %p133 = scmp.ne.s32.totalorder %s118, %s132
      %p134 = scmp.eq.s32.totalorder %s24, 0
      %p135 = por %p133, %p134
      %s137 = sadd.s32 %s136, 1
      %p140 = scmp.eq.s32.totalorder %s18, 1
      %p141 = scmp.ne.s32.totalorder %s136, %s138
      %p142 = scmp.eq.s32.totalorder %s18, 0
      %p143 = por %p141, %p142
      %p144 = scmp.ne.s32.totalorder %s136, %s138
      %p145 = scmp.eq.s32.totalorder %s23, 1
      %p146 = por %p144, %p145
      %p147 = scmp.ne.s32.totalorder %s138, %s139
      %p148 = scmp.eq.s32.totalorder %s23, 0
      %p149 = por %p147, %p148
      %p150 = scmp.ne.s32.totalorder %s138, %s139
      %p151 = scmp.eq.s32.totalorder %s24, 1
      %p152 = por %p150, %p151
      %p154 = scmp.ne.s32.totalorder %s139, %s153
      %p155 = scmp.eq.s32.totalorder %s24, 0
      %p156 = por %p154, %p155
      %s157 = ssub.s32 %s18, %s25
      %p158 = scmp.eq.s32.totalorder %s157, 0
      %s160 = sadd.s32 %s159, 1
      %s161 = scalar_select %p158, %s159, %s160
      %p164 = pneg %p158
      %p165 = scmp.eq.s32.totalorder %s18, 1
      %p166 = por %p164, %p165
      %p167 = scmp.ne.s32.totalorder %s159, %s162
      %p168 = scmp.eq.s32.totalorder %s18, 0
      %p169 = por %p167, %p168
      %p170 = scmp.ne.s32.totalorder %s159, %s162
      %p171 = scmp.eq.s32.totalorder %s23, 1
      %p172 = por %p170, %p171
      %p173 = scmp.ne.s32.totalorder %s162, %s163
      %p174 = scmp.eq.s32.totalorder %s23, 0
      %p175 = por %p173, %p174
      %p176 = scmp.ne.s32.totalorder %s162, %s163
      %p177 = scmp.eq.s32.totalorder %s24, 1
      %p178 = por %p176, %p177
      %p180 = scmp.ne.s32.totalorder %s163, %s179
      %p181 = scmp.eq.s32.totalorder %s24, 0
      %p182 = por %p180, %p181
      %p183 = scmp.le.s32.totalorder 1, %s18
      %p184 = scmp.lt.s32.totalorder %s18, 3
      %p185 = pnand %p183, %p184
      %p186 = pneg %p185
      // Predicated region
      $region9: #{tpu_custom_call.1} parent=5 // pred_check
        _
      $region10: #{tpu_custom_call.1} parent=5 // pred_check_branch
        %188 = sbr.rel (%p185) target = $region12
      $region11: #{tpu_custom_call.1} parent=5 // pred_region
        %s189 = ssub.s32 %s18, 1
        // Predicated region
        $region13: #{tpu_custom_call.1} parent=11 // pred_check
          %p190 = pneg %p65
        $region14: #{tpu_custom_call.1} parent=11 // pred_check_branch
          %192 = sbr.rel (%p190) target = $region16
        $region15: #{tpu_custom_call.1} parent=11 // pred_region
          _
        $region16: #{tpu_custom_call.1} parent=11 // pred_fallthru
          _
        // Predicated region
        $region17: #{tpu_custom_call.1} parent=11 // pred_check
          %p193 = pneg %p86
        $region18: #{tpu_custom_call.1} parent=11 // pred_check_branch
          %195 = sbr.rel (%p193) target = $region20
        $region19: #{tpu_custom_call.1} parent=11 // pred_region
          _
        $region20: #{tpu_custom_call.1} parent=11 // pred_fallthru
          _
        // Predicated region
        $region21: #{tpu_custom_call.1} parent=11 // pred_check
          %p196 = pneg %p107
        $region22: #{tpu_custom_call.1} parent=11 // pred_check_branch
          %198 = sbr.rel (%p196) target = $region24
        $region23: #{tpu_custom_call.1} parent=11 // pred_region
          _
        $region24: #{tpu_custom_call.1} parent=11 // pred_fallthru
          _
        // Predicated region
        $region25: #{tpu_custom_call.1} parent=11 // pred_check
          %p199 = pneg %p128
        $region26: #{tpu_custom_call.1} parent=11 // pred_check_branch
          %201 = sbr.rel (%p199) target = $region28
        $region27: #{tpu_custom_call.1} parent=11 // pred_region
          _
        $region28: #{tpu_custom_call.1} parent=11 // pred_fallthru
          _
        // Predicated region
        $region29: #{tpu_custom_call.1} parent=11 // pred_check
          %p202 = pneg %p149
        $region30: #{tpu_custom_call.1} parent=11 // pred_check_branch
          %204 = sbr.rel (%p202) target = $region32
        $region31: #{tpu_custom_call.1} parent=11 // pred_region
          _
        $region32: #{tpu_custom_call.1} parent=11 // pred_fallthru
          _
      $region12: #{tpu_custom_call.1} parent=5 // pred_fallthru
        _
      %p205 = scmp.lt.s32.totalorder %s18, 2
      // Predicated region
      $region33: #{tpu_custom_call.1} parent=5 // pred_check
        %p206 = pneg %p205
      $region34: #{tpu_custom_call.1} parent=5 // pred_check_branch
        %208 = sbr.rel (%p206) target = $region36
      $region35: #{tpu_custom_call.1} parent=5 // pred_region
        // Predicated region
        $region37: #{tpu_custom_call.1} parent=35 // pred_check
          %p209 = pneg %p38
        $region38: #{tpu_custom_call.1} parent=35 // pred_check_branch
          %211 = sbr.rel (%p209) target = $region40
        $region39: #{tpu_custom_call.1} parent=35 // pred_region
          %s212 = sand.u32 %s28, 1
          %s213 = scalar_lea.sflag [#allocation4], %s212
          %s214 = sand.u32 %s28, 1
          %s215 = smul.addr %s214, 48
          %s216 = scalar_lea.vmem [#allocation3], %s215
          %s218 = ssub.s32 768, 768
          %219 = vsyncadd %s213, %s218
          %s220 = smul.addr %s18, 6
          %s221 = smul.addr %s220, 128
          %s222 = scalar_lea.hbm %s0, %s221
          %s223 = sshll.u32 %s216, 4
          %s224 = int_to_ptr.vmem [resolvable:$true] %s223
          %229 = dma.hbm_to_vmem [thread:$0]  %s222, 768, %s224, %s213, 384, 384, 24
        $region40: #{tpu_custom_call.1} parent=35 // pred_fallthru
          _
      $region36: #{tpu_custom_call.1} parent=5 // pred_fallthru
        _
      %p230 = scmp.le.s32.totalorder 1, %s18
      %p231 = scmp.lt.s32.totalorder %s18, 3
      %p232 = pnand %p230, %p231
      %p233 = pneg %p232
      // Predicated region
      $region41: #{tpu_custom_call.1} parent=5 // pred_check
        _
      $region42: #{tpu_custom_call.1} parent=5 // pred_check_branch
        %235 = sbr.rel (%p232) target = $region44
      $region43: #{tpu_custom_call.1} parent=5 // pred_region
        %s236 = ssub.s32 %s18, 1
        %s237 = sand.u32 %s31, 1
        %s238 = scalar_lea.sflag [#allocation4], %s237
        %s239 = sand.u32 %s31, 1
        %s240 = smul.addr %s239, 48
        %s241 = scalar_lea.vmem [#allocation3], %s240
        // Predicated region
        $region45: #{tpu_custom_call.1} parent=43 // pred_check
          %p242 = pneg %p44
        $region46: #{tpu_custom_call.1} parent=43 // pred_check_branch
          %244 = sbr.rel (%p242) target = $region48
        $region47: #{tpu_custom_call.1} parent=43 // pred_region
          %245 = dma.done %s238, 768
        $region48: #{tpu_custom_call.1} parent=43 // pred_fallthru
          _
        %s246 = sand.u32 %s31, 1
        %s247 = scalar_lea.sflag [#allocation4], %s246
        %s248 = sand.u32 %s31, 1
        %s249 = smul.addr %s248, 48
        %s250 = scalar_lea.vmem [#allocation3], %s249
        %p251 = pneg %p44
        %p252 = pneg %p41
        %p253 = pneg %p65
        %p254 = pneg %p62
        %p255 = pneg %p86
        %p256 = pneg %p83
        %p257 = pneg %p107
        %p258 = pneg %p104
        %p259 = pneg %p128
        %p260 = pneg %p125
        %p261 = pneg %p149
        %p262 = pneg %p146
        %p263 = pneg %p175
        %p264 = pneg %p172
        %s265 = sand.u32 %s162, 1
        %s266 = scalar_lea.sflag [#allocation5], %s265
        %s267 = sand.u32 %s162, 1
        %s268 = smul.addr %s267, 48
        %s269 = scalar_lea.vmem [#allocation6], %s268
        %vm271 = vcmask 150528
        %272 = vst.msk [vmem:[#allocation2] sm:$0xf] %vm271, 0
        %273 = vst.msk [vmem:[#allocation2 + $0xc] sm:$0xf] %vm271, 0
        %vm274 = vcmask 552328
        %275 = vst.msk [vmem:[#allocation2 + $0x8] sm:$0xf] %vm274, 0
        %276 = vst.msk [vmem:[#allocation2 + $0x14] sm:$0xf] %vm274, 0
        %v277 = vld [vmem:[%s2] sm:$0xff]
        %v278 = vld [vmem:[%s2 + $0x8] sm:$0xff]
        %v279 = vld [vmem:[%s3] sm:$0xff]
        %v280 = vld [vmem:[%s3 + $0x8] sm:$0xff]
        %v281 = vld [vmem:[%s4] sm:$0xff]
        %v282 = vld [vmem:[%s4 + $0x8] sm:$0xff]
        %v283 = vld [vmem:[%s5] sm:$0xff]
        %v284 = vld [vmem:[%s5 + $0x8] sm:$0xff]
        %v285 = vld [vmem:[%s241] sm:$0xff]
        %v286 = vld [vmem:[%s241 + $0x8] sm:$0xff]
        %v287 = vld [vmem:[%s241 + $0x10] sm:$0xff]
        %v288 = vld [vmem:[%s241 + $0x18] sm:$0xff]
        %v289 = vld [vmem:[%s241 + $0x20] sm:$0xff]
        %v290 = vld [vmem:[%s241 + $0x28] sm:$0xff]
        %v291 = vpack.c.bf16 %v288, %v285
        %v292 = vpack.c.bf16 %v289, %v286
        %v293 = vpack.c.bf16 %v290, %v287
        %297 = vrot.lane.b32.xlu0 %v291, 127
        %v298 = vpop.permute.xlu0 %297
        %299 = vrot.lane.b32.xlu0 %v292, 127
        %v300 = vpop.permute.xlu0 %299
        %301 = vrot.lane.b32.xlu0 %v293, 127
        %v302 = vpop.permute.xlu0 %301
        %vm303 = vcmask 1039360
        %v304 = vsel %vm303, %v298, %v300
        %v305 = vsel %vm303, %v300, %v302
        %309 = vrot.lane.b32.xlu0 %v291, 126
        %v310 = vpop.permute.xlu0 %309
        %311 = vrot.lane.b32.xlu0 %v292, 126
        %v312 = vpop.permute.xlu0 %311
        %313 = vrot.lane.b32.xlu0 %v293, 126
        %v314 = vpop.permute.xlu0 %313
        %vm315 = vcmask 1031168
        %v316 = vsel %vm315, %v310, %v312
        %v317 = vsel %vm315, %v312, %v314
        %321 = vrot.lane.b32.xlu0 %v291, 110
        %v322 = vpop.permute.xlu0 %321
        %323 = vrot.lane.b32.xlu0 %v292, 110
        %v324 = vpop.permute.xlu0 %323
        %325 = vrot.lane.b32.xlu0 %v293, 110
        %v326 = vpop.permute.xlu0 %325
        %vm327 = vcmask 900096
        %v328 = vsel %vm327, %v322, %v324
        %v329 = vsel %vm327, %v324, %v326
        %333 = vrot.lane.b32.xlu0 %v291, 109
        %v334 = vpop.permute.xlu0 %333
        %335 = vrot.lane.b32.xlu0 %v292, 109
        %v336 = vpop.permute.xlu0 %335
        %337 = vrot.lane.b32.xlu0 %v293, 109
        %v338 = vpop.permute.xlu0 %337
        %vm339 = vcmask 891904
        %v340 = vsel %vm339, %v334, %v336
        %v341 = vsel %vm339, %v336, %v338
        %345 = vrot.lane.b32.xlu0 %v291, 108
        %v346 = vpop.permute.xlu0 %345
        %347 = vrot.lane.b32.xlu0 %v292, 108
        %v348 = vpop.permute.xlu0 %347
        %349 = vrot.lane.b32.xlu0 %v293, 108
        %v350 = vpop.permute.xlu0 %349
        %vm351 = vcmask 883712
        %v352 = vsel %vm351, %v346, %v348
        %v353 = vsel %vm351, %v348, %v350
        %357 = vrot.lane.b32.xlu0 %v291, 92
        %v358 = vpop.permute.xlu0 %357
        %359 = vrot.lane.b32.xlu0 %v292, 92
        %v360 = vpop.permute.xlu0 %359
        %361 = vrot.lane.b32.xlu0 %v293, 92
        %v362 = vpop.permute.xlu0 %361
        %vm363 = vcmask 752640
        %v364 = vsel %vm363, %v358, %v360
        %v365 = vsel %vm363, %v360, %v362
        %369 = vrot.lane.b32.xlu0 %v291, 91
        %v370 = vpop.permute.xlu0 %369
        %371 = vrot.lane.b32.xlu0 %v292, 91
        %v372 = vpop.permute.xlu0 %371
        %373 = vrot.lane.b32.xlu0 %v293, 91
        %v374 = vpop.permute.xlu0 %373
        %vm375 = vcmask 744448
        %v376 = vsel %vm375, %v370, %v372
        %v377 = vsel %vm375, %v372, %v374
        %381 = vrot.lane.b32.xlu0 %v291, 90
        %v382 = vpop.permute.xlu0 %381
        %383 = vrot.lane.b32.xlu0 %v292, 90
        %v384 = vpop.permute.xlu0 %383
        %385 = vrot.lane.b32.xlu0 %v293, 90
        %v386 = vpop.permute.xlu0 %385
        %vm387 = vcmask 736256
        %v388 = vsel %vm387, %v382, %v384
        %v389 = vsel %vm387, %v384, %v386
        %394 = vset.pattern.permute.xlu0 0
        %395 = vperm.xlu0 %394, %v279
        %v396 = vpop.permute.xlu0 %395
        %399 = vset.pattern.permute.xlu0 0
        %400 = vperm.xlu0 %399, %v280
        %v401 = vpop.permute.xlu0 %400
        %v405 = vunpack.c.l.b16 %v277
        %v406 = vunpack.c.h.b16 %v277
        %v407 = vunpack.c.l.b16 %v278
        %v408 = vunpack.c.h.b16 %v278
        %v409 = vpack.c.b16 %v407, %v405
        %v410 = vpack.c.b16 %v408, %v406
        %vm412 = vcmask 130048
        %v414 = vsel %vm412, %v410, 0
        %416 = vmatprep.subr.bf16.mxu0 %v377
        %417 = vmatpush1.bf16.msra.mxu0 %v376
        %418 = vmatprep.subr.bf16.mxu0 %v365
        %419 = vmatpush1.bf16.msra.mxu0 %v364
        %420 = vmatprep.subr.bf16.mxu0 %v353
        %421 = vmatpush1.bf16.msra.mxu0 %v352
        %422 = vmatprep.subr.bf16.mxu0 %v341
        %423 = vmatpush1.bf16.msra.mxu0 %v340
        %424 = vmatprep.subr.bf16.mxu0 %v329
        %425 = vmatpush1.bf16.msra.mxu0 %v328
        %426 = vmatprep.subr.bf16.mxu0 %v317
        %427 = vmatpush1.bf16.msra.mxu0 %v316
        %428 = vmatprep.subr.bf16.mxu0 %v305
        %429 = vmatpush1.bf16.msra.mxu0 %v304
        %430 = vmatprep.subr.bf16.mxu0 %v292
        %431 = vmatpush1.bf16.msra.mxu0 %v291
        %432 = vmatprep.subr.bf16.mxu0 0
        %433 = vmatpush2.bf16.msra.mxu0 0
        %434 = vmatprep.subr.bf16.mxu0 0
        %435 = vmatpush2.bf16.msra.mxu0 0
        %436 = vmatprep.subr.bf16.mxu0 0
        %437 = vmatpush2.bf16.msra.mxu0 0
        %438 = vmatprep.subr.bf16.mxu0 0
        %439 = vmatpush2.bf16.msra.mxu0 0
        %440 = vmatprep.subr.bf16.mxu0 0
        %441 = vmatpush2.bf16.msra.mxu0 0
        %442 = vmatprep.subr.bf16.mxu0 0
        %443 = vmatpush2.bf16.msra.mxu0 0
        %444 = vmatprep.subr.bf16.mxu0 0
        %445 = vmatpush2.bf16.msra.mxu0 0
        %446 = vmatprep.subr.bf16.mxu0 %v389
        %447 = vmatpush2.bf16.msra.mxu0 %v388
        %448 = vmatprep.mubr.bf16.mxu0 %v414
        %449 = vmatmul.mubr.bf16.gmra.mxu0 %v409
        %v450 = vpop.f32.mrf.mxu0
        %v451 = vadd.f32 %v396, %v450
        %v452 = vpop.f32.mrf.mxu0
        %v453 = vadd.f32 %v396, %v452
        %v454 = vpop.f32.mrf.mxu0
        %v455 = vadd.f32 %v401, %v454
        %v456 = vpop.f32.mrf.mxu0
        %v457 = vadd.f32 %v401, %v456
        %458 = vdwg.mxu0
        %459 = vmatprep.subr.bf16.mxu0 0
        %460 = vmatpush1.bf16.msra.mxu0 %v374
        %461 = vmatprep.subr.bf16.mxu0 0
        %462 = vmatpush1.bf16.msra.mxu0 %v362
        %463 = vmatprep.subr.bf16.mxu0 0
        %464 = vmatpush1.bf16.msra.mxu0 %v350
        %465 = vmatprep.subr.bf16.mxu0 0
        %466 = vmatpush1.bf16.msra.mxu0 %v338
        %467 = vmatprep.subr.bf16.mxu0 0
        %468 = vmatpush1.bf16.msra.mxu0 %v326
        %469 = vmatprep.subr.bf16.mxu0 0
        %470 = vmatpush1.bf16.msra.mxu0 %v314
        %471 = vmatprep.subr.bf16.mxu0 0
        %472 = vmatpush1.bf16.msra.mxu0 %v302
        %473 = vmatprep.subr.bf16.mxu0 0
        %474 = vmatpush1.bf16.msra.mxu0 %v293
        %475 = vmatprep.subr.bf16.mxu0 0
        %476 = vmatpush2.bf16.msra.mxu0 0
        %477 = vmatprep.subr.bf16.mxu0 0
        %478 = vmatpush2.bf16.msra.mxu0 0
        %479 = vmatprep.subr.bf16.mxu0 0
        %480 = vmatpush2.bf16.msra.mxu0 0
        %481 = vmatprep.subr.bf16.mxu0 0
        %482 = vmatpush2.bf16.msra.mxu0 0
        %483 = vmatprep.subr.bf16.mxu0 0
        %484 = vmatpush2.bf16.msra.mxu0 0
        %485 = vmatprep.subr.bf16.mxu0 0
        %486 = vmatpush2.bf16.msra.mxu0 0
        %487 = vmatprep.subr.bf16.mxu0 0
        %488 = vmatpush2.bf16.msra.mxu0 0
        %489 = vmatprep.subr.bf16.mxu0 0
        %490 = vmatpush2.bf16.msra.mxu0 %v386
        %491 = vmatprep.mubr.bf16.mxu0 %v414
        %492 = vmatmul.mubr.bf16.gmra.mxu0 %v409
        %v493 = vpop.f32.mrf.mxu0
        %v494 = vadd.f32 %v396, %v493
        %v495 = vpop.f32.mrf.mxu0
        %v496 = vpop.f32.mrf.mxu0
        %v497 = vadd.f32 %v401, %v496
        %v498 = vpop.f32.mrf.mxu0
        %499 = vdwg.mxu0
        %v500 = vmax.f32 %v451, 0.0
        %v501 = vmax.f32 %v453, 0.0
        %v502 = vmax.f32 %v494, 0.0
        %v503 = vmax.f32 %v455, 0.0
        %v504 = vmax.f32 %v457, 0.0
        %v505 = vmax.f32 %v497, 0.0
        %v506 = vld [vmem:[%s1] sm:$0x7]
        %v508 = vlaneseq
        %v509 = vshrl.u32 %v508, 7
        %v510 = vsub.s32 0, %v509
        %v511 = vrot.slane %v506, %v510
        %v512 = vlaneseq
        %v513 = vshrl.u32 %v512, 7
        %v514 = vsub.s32 1, %v513
        %v515 = vrot.slane %v506, %v514
        %v516 = vlaneseq
        %v517 = vshrl.u32 %v516, 7
        %v518 = vsub.s32 2, %v517
        %v519 = vrot.slane %v506, %v518
        %v523 = vmul.f32 %v500, %v511
        %v524 = vmul.f32 %v501, %v515
        %v525 = vmul.f32 %v502, %v519
        %v526 = vmul.f32 %v503, %v511
        %v527 = vmul.f32 %v504, %v515
        %v528 = vmul.f32 %v505, %v519
        %v529 = vpack.c.bf16 %v526, %v523
        %v530 = vpack.c.bf16 %v527, %v524
        %v531 = vpack.c.bf16 %v528, %v525
        %v535 = vunpack.c.l.b16 %v529
        %v536 = vunpack.c.l.b16 %v530
        %v537 = vunpack.c.l.b16 %v531
        %v538 = vunpack.c.h.b16 %v529
        %v539 = vunpack.c.h.b16 %v530
        %v540 = vunpack.c.h.b16 %v531
        %v541 = vpack.c.b16 %v536, %v535
        %v542 = vpack.c.b16 %v537, %v537
        %v543 = vpack.c.b16 %v539, %v538
        %v544 = vpack.c.b16 %v540, %v540
        %545 = vrot.lane.b32.xlu0 %v541, 19
        %v546 = vpop.permute.xlu0 %545
        %547 = vrot.lane.b32.xlu0 %v542, 19
        %v548 = vpop.permute.xlu0 %547
        %549 = vrot.lane.b32.xlu0 %v543, 19
        %v550 = vpop.permute.xlu0 %549
        %551 = vrot.lane.b32.xlu0 %v544, 19
        %v552 = vpop.permute.xlu0 %551
        %v553 = vrot.slane %v546, 4
        %v554 = vrot.slane %v550, 4
        %vm555 = vcmask 154624
        %v556 = vsel %vm555, %v553, %v546
        %v557 = vsel %vm555, %v553, %v548
        %v558 = vsel %vm555, %v554, %v550
        %v559 = vsel %vm555, %v554, %v552
        %vm564 = vcmask 1043608
        %vm565 = vcmask 1047556
        %vm566 = vmor %vm565, %vm564
        %567 = vst.msk [vmem:[#allocation2] sm:$0xff] %vm566, %v556
        %vm568 = vcmask 396288
        %569 = vst.msk [vmem:[#allocation2 + $0x8] sm:$0xf] %vm568, %v557
        %570 = vst.msk [vmem:[#allocation2 + $0xc] sm:$0xff] %vm566, %v558
        %571 = vst.msk [vmem:[#allocation2 + $0x14] sm:$0xf] %vm568, %v559
        %v572 = vld [vmem:[#allocation2] sm:$0xff]
        %v573 = vld [vmem:[#allocation2 + $0x8] sm:$0xf]
        %v574 = vld [vmem:[#allocation2 + $0xc] sm:$0xff]
        %v575 = vld [vmem:[#allocation2 + $0x14] sm:$0xf]
        %v580 = vunpack.c.l.b16 %v572
        %v581 = vunpack.c.h.b16 %v572
        %v582 = vunpack.c.l.b16 %v573
        %v583 = vunpack.c.l.b16 %v574
        %v584 = vunpack.c.h.b16 %v574
        %v585 = vunpack.c.l.b16 %v575
        %v586 = vpack.c.b16 %v583, %v580
        %v587 = vpack.c.b16 %v584, %v581
        %v588 = vpack.c.b16 %v585, %v582
        %592 = vrot.lane.b32.xlu0 %v586, 127
        %v593 = vpop.permute.xlu0 %592
        %594 = vrot.lane.b32.xlu0 %v587, 127
        %v595 = vpop.permute.xlu0 %594
        %596 = vrot.lane.b32.xlu0 %v588, 127
        %v597 = vpop.permute.xlu0 %596
        %v598 = vsel %vm303, %v593, %v595
        %v599 = vsel %vm303, %v595, %v597
        %603 = vrot.lane.b32.xlu0 %v586, 126
        %v604 = vpop.permute.xlu0 %603
        %605 = vrot.lane.b32.xlu0 %v587, 126
        %v606 = vpop.permute.xlu0 %605
        %607 = vrot.lane.b32.xlu0 %v588, 126
        %v608 = vpop.permute.xlu0 %607
        %v609 = vsel %vm315, %v604, %v606
        %v610 = vsel %vm315, %v606, %v608
        %614 = vrot.lane.b32.xlu0 %v586, 110
        %v615 = vpop.permute.xlu0 %614
        %616 = vrot.lane.b32.xlu0 %v587, 110
        %v617 = vpop.permute.xlu0 %616
        %618 = vrot.lane.b32.xlu0 %v588, 110
        %v619 = vpop.permute.xlu0 %618
        %v620 = vsel %vm327, %v615, %v617
        %v621 = vsel %vm327, %v617, %v619
        %625 = vrot.lane.b32.xlu0 %v586, 109
        %v626 = vpop.permute.xlu0 %625
        %627 = vrot.lane.b32.xlu0 %v587, 109
        %v628 = vpop.permute.xlu0 %627
        %629 = vrot.lane.b32.xlu0 %v588, 109
        %v630 = vpop.permute.xlu0 %629
        %v631 = vsel %vm339, %v626, %v628
        %v632 = vsel %vm339, %v628, %v630
        %636 = vrot.lane.b32.xlu0 %v586, 108
        %v637 = vpop.permute.xlu0 %636
        %638 = vrot.lane.b32.xlu0 %v587, 108
        %v639 = vpop.permute.xlu0 %638
        %640 = vrot.lane.b32.xlu0 %v588, 108
        %v641 = vpop.permute.xlu0 %640
        %v642 = vsel %vm351, %v637, %v639
        %v643 = vsel %vm351, %v639, %v641
        %647 = vrot.lane.b32.xlu0 %v586, 92
        %v648 = vpop.permute.xlu0 %647
        %649 = vrot.lane.b32.xlu0 %v587, 92
        %v650 = vpop.permute.xlu0 %649
        %651 = vrot.lane.b32.xlu0 %v588, 92
        %v652 = vpop.permute.xlu0 %651
        %v653 = vsel %vm363, %v648, %v650
        %v654 = vsel %vm363, %v650, %v652
        %658 = vrot.lane.b32.xlu0 %v586, 91
        %v659 = vpop.permute.xlu0 %658
        %660 = vrot.lane.b32.xlu0 %v587, 91
        %v661 = vpop.permute.xlu0 %660
        %662 = vrot.lane.b32.xlu0 %v588, 91
        %v663 = vpop.permute.xlu0 %662
        %v664 = vsel %vm375, %v659, %v661
        %v665 = vsel %vm375, %v661, %v663
        %669 = vrot.lane.b32.xlu0 %v586, 90
        %v670 = vpop.permute.xlu0 %669
        %671 = vrot.lane.b32.xlu0 %v587, 90
        %v672 = vpop.permute.xlu0 %671
        %673 = vrot.lane.b32.xlu0 %v588, 90
        %v674 = vpop.permute.xlu0 %673
        %v675 = vsel %vm387, %v670, %v672
        %v676 = vsel %vm387, %v672, %v674
        %681 = vset.pattern.permute.xlu0 0
        %682 = vperm.xlu0 %681, %v283
        %v683 = vpop.permute.xlu0 %682
        %686 = vset.pattern.permute.xlu0 0
        %687 = vperm.xlu0 %686, %v284
        %v688 = vpop.permute.xlu0 %687
        %v692 = vunpack.c.l.b16 %v281
        %v693 = vunpack.c.h.b16 %v281
        %v694 = vunpack.c.l.b16 %v282
        %v695 = vunpack.c.h.b16 %v282
        %v696 = vpack.c.b16 %v694, %v692
        %v697 = vpack.c.b16 %v695, %v693
        %v700 = vsel %vm412, %v697, 0
        %702 = vmatprep.subr.bf16.mxu0 %v665
        %703 = vmatpush1.bf16.msra.mxu0 %v664
        %704 = vmatprep.subr.bf16.mxu0 %v654
        %705 = vmatpush1.bf16.msra.mxu0 %v653
        %706 = vmatprep.subr.bf16.mxu0 %v643
        %707 = vmatpush1.bf16.msra.mxu0 %v642
        %708 = vmatprep.subr.bf16.mxu0 %v632
        %709 = vmatpush1.bf16.msra.mxu0 %v631
        %710 = vmatprep.subr.bf16.mxu0 %v621
        %711 = vmatpush1.bf16.msra.mxu0 %v620
        %712 = vmatprep.subr.bf16.mxu0 %v610
        %713 = vmatpush1.bf16.msra.mxu0 %v609
        %714 = vmatprep.subr.bf16.mxu0 %v599
        %715 = vmatpush1.bf16.msra.mxu0 %v598
        %716 = vmatprep.subr.bf16.mxu0 %v587
        %717 = vmatpush1.bf16.msra.mxu0 %v586
        %718 = vmatprep.subr.bf16.mxu0 0
        %719 = vmatpush2.bf16.msra.mxu0 0
        %720 = vmatprep.subr.bf16.mxu0 0
        %721 = vmatpush2.bf16.msra.mxu0 0
        %722 = vmatprep.subr.bf16.mxu0 0
        %723 = vmatpush2.bf16.msra.mxu0 0
        %724 = vmatprep.subr.bf16.mxu0 0
        %725 = vmatpush2.bf16.msra.mxu0 0
        %726 = vmatprep.subr.bf16.mxu0 0
        %727 = vmatpush2.bf16.msra.mxu0 0
        %728 = vmatprep.subr.bf16.mxu0 0
        %729 = vmatpush2.bf16.msra.mxu0 0
        %730 = vmatprep.subr.bf16.mxu0 0
        %731 = vmatpush2.bf16.msra.mxu0 0
        %732 = vmatprep.subr.bf16.mxu0 %v676
        %733 = vmatpush2.bf16.msra.mxu0 %v675
        %734 = vmatprep.mubr.bf16.mxu0 %v700
        %735 = vmatmul.mubr.bf16.gmra.mxu0 %v696
        %v736 = vpop.f32.mrf.mxu0
        %v737 = vadd.f32 %v683, %v736
        %v738 = vpop.f32.mrf.mxu0
        %v739 = vadd.f32 %v683, %v738
        %v740 = vpop.f32.mrf.mxu0
        %v741 = vadd.f32 %v688, %v740
        %v742 = vpop.f32.mrf.mxu0
        %v743 = vadd.f32 %v688, %v742
        %744 = vdwg.mxu0
        %745 = vmatprep.subr.bf16.mxu0 0
        %746 = vmatpush1.bf16.msra.mxu0 %v663
        %747 = vmatprep.subr.bf16.mxu0 0
        %748 = vmatpush1.bf16.msra.mxu0 %v652
        %749 = vmatprep.subr.bf16.mxu0 0
        %750 = vmatpush1.bf16.msra.mxu0 %v641
        %751 = vmatprep.subr.bf16.mxu0 0
        %752 = vmatpush1.bf16.msra.mxu0 %v630
        %753 = vmatprep.subr.bf16.mxu0 0
        %754 = vmatpush1.bf16.msra.mxu0 %v619
        %755 = vmatprep.subr.bf16.mxu0 0
        %756 = vmatpush1.bf16.msra.mxu0 %v608
        %757 = vmatprep.subr.bf16.mxu0 0
        %758 = vmatpush1.bf16.msra.mxu0 %v597
        %759 = vmatprep.subr.bf16.mxu0 0
        %760 = vmatpush1.bf16.msra.mxu0 %v588
        %761 = vmatprep.subr.bf16.mxu0 0
        %762 = vmatpush2.bf16.msra.mxu0 0
        %763 = vmatprep.subr.bf16.mxu0 0
        %764 = vmatpush2.bf16.msra.mxu0 0
        %765 = vmatprep.subr.bf16.mxu0 0
        %766 = vmatpush2.bf16.msra.mxu0 0
        %767 = vmatprep.subr.bf16.mxu0 0
        %768 = vmatpush2.bf16.msra.mxu0 0
        %769 = vmatprep.subr.bf16.mxu0 0
        %770 = vmatpush2.bf16.msra.mxu0 0
        %771 = vmatprep.subr.bf16.mxu0 0
        %772 = vmatpush2.bf16.msra.mxu0 0
        %773 = vmatprep.subr.bf16.mxu0 0
        %774 = vmatpush2.bf16.msra.mxu0 0
        %775 = vmatprep.subr.bf16.mxu0 0
        %776 = vmatpush2.bf16.msra.mxu0 %v674
        %777 = vmatprep.mubr.bf16.mxu0 %v700
        %778 = vmatmul.mubr.bf16.gmra.mxu0 %v696
        %v779 = vpop.f32.mrf.mxu0
        %v780 = vadd.f32 %v683, %v779
        %v781 = vpop.f32.mrf.mxu0
        %v782 = vpop.f32.mrf.mxu0
        %v783 = vadd.f32 %v688, %v782
        %v784 = vpop.f32.mrf.mxu0
        %785 = vdwg.mxu0
        %v786 = vld [vmem:[%s241] sm:$0xff]
        %v787 = vld [vmem:[%s241 + $0x8] sm:$0xff]
        %v788 = vld [vmem:[%s241 + $0x10] sm:$0xff]
        %v789 = vld [vmem:[%s241 + $0x18] sm:$0xff]
        %v790 = vld [vmem:[%s241 + $0x20] sm:$0xff]
        %v791 = vld [vmem:[%s241 + $0x28] sm:$0xff]
        %798 = vrot.lane.b32.xlu0 %v786, 109
        %v799 = vpop.permute.xlu0 %798
        %800 = vrot.lane.b32.xlu0 %v787, 109
        %v801 = vpop.permute.xlu0 %800
        %802 = vrot.lane.b32.xlu0 %v788, 109
        %v803 = vpop.permute.xlu0 %802
        %804 = vrot.lane.b32.xlu0 %v789, 109
        %v805 = vpop.permute.xlu0 %804
        %806 = vrot.lane.b32.xlu0 %v790, 109
        %v807 = vpop.permute.xlu0 %806
        %808 = vrot.lane.b32.xlu0 %v791, 109
        %v809 = vpop.permute.xlu0 %808
        %vm810 = vcmask 891904
        %v811 = vsel %vm810, %v799, %v801
        %v812 = vsel %vm810, %v801, %v803
        %v813 = vsel %vm810, %v805, %v807
        %v814 = vsel %vm810, %v807, %v809
        %v821 = vadd.f32 %v737, %v811
        %v822 = vadd.f32 %v739, %v812
        %v823 = vadd.f32 %v780, %v803
        %v824 = vadd.f32 %v741, %v813
        %v825 = vadd.f32 %v743, %v814
        %v826 = vadd.f32 %v783, %v809
        %827 = vst [vmem:[%s269] sm:$0xff] %v821
        %828 = vst [vmem:[%s269 + $0x8] sm:$0xff] %v822
        %vm829 = vcmask 244736
        %830 = vst.msk [vmem:[%s269 + $0x10] sm:$0xff] %vm829, %v823
        %831 = vst [vmem:[%s269 + $0x18] sm:$0xff] %v824
        %832 = vst [vmem:[%s269 + $0x20] sm:$0xff] %v825
        %833 = vst.msk [vmem:[%s269 + $0x28] sm:$0xff] %vm829, %v826
        %vm834 = vcmask 261360
        %835 = vst.msk [vmem:[%s269 + $0x10] sm:$0xff] %vm834, 0.0
        %836 = vst.msk [vmem:[%s269 + $0x28] sm:$0xff] %vm834, 0.0
        %s837 = sand.u32 %s162, 1
        %s838 = scalar_lea.sflag [#allocation5], %s837
        %s839 = sand.u32 %s162, 1
        %s840 = smul.addr %s839, 48
        %s841 = scalar_lea.vmem [#allocation6], %s840
        // Predicated region
        $region49: #{tpu_custom_call.1} parent=43 // pred_check
          %p842 = pneg %p172
        $region50: #{tpu_custom_call.1} parent=43 // pred_check_branch
          %844 = sbr.rel (%p842) target = $region52
        $region51: #{tpu_custom_call.1} parent=43 // pred_region
          %s846 = ssub.s32 768, 768
          %847 = vsyncadd %s838, %s846
          %s848 = smul.addr %s23, 6
          %s849 = smul.addr %s848, 128
          %s850 = scalar_lea.hbm %s6, %s849
          %s851 = sshll.u32 %s841, 4
          %s852 = int_to_ptr.vmem [resolvable:$true] %s851
          %857 = dma.vmem_to_hbm [thread:$0]  %s852, 768, %s850, %s838, 384, 384, 24
        $region52: #{tpu_custom_call.1} parent=43 // pred_fallthru
          _
      $region44: #{tpu_custom_call.1} parent=5 // pred_fallthru
        _
      %p858 = scmp.le.s32.totalorder 2, %s18
      // Predicated region
      $region53: #{tpu_custom_call.1} parent=5 // pred_check
        %p859 = pneg %p858
      $region54: #{tpu_custom_call.1} parent=5 // pred_check_branch
        %861 = sbr.rel (%p859) target = $region56
      $region55: #{tpu_custom_call.1} parent=5 // pred_region
        %s862 = ssub.s32 %s18, 2
        // Predicated region
        $region57: #{tpu_custom_call.1} parent=55 // pred_check
          %p863 = pneg %p178
        $region58: #{tpu_custom_call.1} parent=55 // pred_check_branch
          %865 = sbr.rel (%p863) target = $region60
        $region59: #{tpu_custom_call.1} parent=55 // pred_region
          %s866 = sand.u32 %s163, 1
          %s867 = scalar_lea.sflag [#allocation5], %s866
          %s868 = sand.u32 %s163, 1
          %s869 = smul.addr %s868, 48
          %s870 = scalar_lea.vmem [#allocation6], %s869
          %871 = dma.done %s867, 768
        $region60: #{tpu_custom_call.1} parent=55 // pred_fallthru
          _
      $region56: #{tpu_custom_call.1} parent=5 // pred_fallthru
        _
    $region6: #{tpu_custom_call.1} parent=1 // loop_footer
      %s22 = sadd.s32 1, %s18
    $region7: #{tpu_custom_call.1} parent=1 // loop_footer_branch
      %17 = sbr.rel target = $region3
    $region8: #{tpu_custom_call.1} parent=1 // loop_exit
      _
    %872 = vsyncpa [#allocation4], 1
    %s873 = scalar_lea.sflag [#allocation4], 1
    %874 = vsyncpa %s873, 1
    %875 = vsyncpa [#allocation5], 1
    %s876 = scalar_lea.sflag [#allocation5], 1
    %877 = vsyncpa %s876, 1

</llo_original>
